<compile_context>
chip_gen: v7x
topology: tpu7x:2x2x1
jax: 0.10.0
libtpu: 0.0.40
codegen_flags: <defaults>
</compile_context>

<pallas_src>
import functools
import math

import jax
import jax.numpy as jnp
from jax import lax
from jax.experimental import pallas as pl
from jax.experimental.pallas import tpu as pltpu


def _cdiv(a, b):
    return -(-a // b)


def _token_loss_kernel(logits_ref, tgt_ref, mask_ref,
                       kl_out, acc_out, msum_out,
                       m_run, l_run, s_run, p_run, sums,
                       *, n_rows, row_tile, row_steps,
                       v_chunk, v_steps, vocab_size,
                       pad_col, padding_idx,
                       confidence, smoothing_value, const_term, lse_coef,
                       col_mask_needed):
    c = pl.program_id(0)   # TensorCore partial (core-parallel / parallel)
    r = pl.program_id(1)   # row-block step                       ("arbitrary")
    v = pl.program_id(2)   # vocab-chunk step, innermost reduction ("arbitrary")

    # Reset the per-core scalar totals at the first step of this core's sub-grid.
    @pl.when(jnp.logical_and(r == 0, v == 0))
    def _():
        sums[0] = jnp.float32(0.0)   # KL sum
        sums[1] = jnp.float32(0.0)   # correct-prediction sum
        sums[2] = jnp.float32(0.0)   # mask sum

    # Reset the per-row online-softmax carry at the first vocab chunk.
    @pl.when(v == 0)
    def _():
        m_run[...] = jnp.full(m_run.shape, -jnp.inf, m_run.dtype)
        l_run[...] = jnp.zeros(l_run.shape, l_run.dtype)
        s_run[...] = jnp.zeros(s_run.shape, s_run.dtype)
        p_run[...] = jnp.full(p_run.shape, vocab_size, p_run.dtype)

    x = logits_ref[...].astype(jnp.float32)          # (TN, VC), cast in VMEM
    t = tgt_ref[...]                                 # (TN, 1) int32
    tn, vc = x.shape

    # Column ids as a (1, VC) vector; compares broadcast against (TN, 1) operands.
    col = v * v_chunk + lax.broadcasted_iota(jnp.int32, (1, vc), 1)

    if col_mask_needed:                              # ragged vocab tail only
        col_ok = col < vocab_size                    # (1, VC)
        x_m = jnp.where(col_ok, x, -jnp.inf)
    else:
        x_m = x

    # ---- online softmax pieces (running max + rescaled sum-exp) ------------
    local_m = jnp.max(x_m, axis=-1, keepdims=True)   # (TN, 1)
    m_old = m_run[...]
    m_new = jnp.maximum(m_old, local_m)
    p = jnp.exp(x_m - m_new)                         # masked cols -> exp(-inf)=0
    l_run[...] = (l_run[...] * jnp.exp(m_old - m_new)
                  + jnp.sum(p, axis=-1, keepdims=True))

    # ---- single merged weighted raw-logit reduction -------------------------
    #   coeff = -confidence at col==target, 0 at col==pad, -smoothing elsewhere
    #   (KL row = const_term + sum_j coeff_j * x_j + lse_coef * logsumexp(x))
    base_w = jnp.where(col == pad_col, 0.0, -smoothing_value)   # (1, VC)
    w = jnp.where(col == t, -confidence, base_w)                # (TN, VC)
    wx = w * x
    if col_mask_needed:
        wx = jnp.where(col_ok, wx, 0.0)
    s_run[...] += jnp.sum(wx, axis=-1, keepdims=True)

    # ---- exact first-index argmax (chunks arrive in increasing column order) -
    cand = jnp.min(jnp.where(x_m == local_m, col, vocab_size),
                   axis=-1, keepdims=True)
    p_run[...] = jnp.where(local_m > m_old, cand, p_run[...])
    m_run[...] = m_new

    # ---- per-row finalize at the last vocab chunk ----------------------------
    @pl.when(v == v_steps - 1)
    def _():
        # UNclamped block id: duplicated / tail blocks contribute exactly zero.
        block_id = c * row_steps + r
        row_id = block_id * row_tile + lax.broadcasted_iota(jnp.int32, (tn, 1), 0)
        in_range = row_id < n_rows

        msk = jnp.where(in_range, mask_ref[...].astype(jnp.float32), 0.0)
        lse = m_run[...] + jnp.log(l_run[...])       # log-sum-exp of raw logits
        kl_row = const_term + s_run[...] + lse_coef * lse
        row_ok = jnp.logical_and(in_range, t != padding_idx)
        kl_row = jnp.where(row_ok, kl_row, 0.0)
        correct = jnp.where(p_run[...] == t, msk, 0.0)

        sums[0] += jnp.sum(kl_row)
        sums[1] += jnp.sum(correct)
        sums[2] += jnp.sum(msk)

    # ---- write the per-core partials once, at the very last step -------------
    @pl.when(jnp.logical_and(r == row_steps - 1, v == v_steps - 1))
    def _():
        kl_out[...] = jnp.broadcast_to(sums[0], kl_out.shape)
        acc_out[...] = jnp.broadcast_to(sums[1], acc_out.shape)
        msum_out[...] = jnp.broadcast_to(sums[2], msum_out.shape)


def _vmem_limit_bytes():
    try:
        cap = int(pltpu.get_tpu_info().vmem_capacity_bytes)
    except Exception:
        cap = 64 * 1024 * 1024        # v7x-safe fallback
    return min(cap * 3 // 4, 100 * 1024 * 1024)


def _tc_split():
    """Returns (TensorCores per device, semantics for the core grid axis)."""
    try:
        kind = jax.devices()[0].device_kind.lower()
    except Exception:
        return 1, "arbitrary"
    if "v7" in kind:                                   # 2 TCs; needs CORE_PARALLEL
        return 2, getattr(pltpu, "CORE_PARALLEL", "parallel")
    if "lite" in kind or "v5e" in kind or "v6e" in kind:
        return 1, "arbitrary"                          # single TensorCore
    if "v4" in kind or "v5p" in kind:                  # megacore: "parallel" shards
        return 2, "parallel"
    return 1, "arbitrary"


_V_CHUNK = 2048            # lane-aligned vocab slab for large vocabularies
_V_CHUNK_FULL_MAX = 4096   # at or below this, take the whole vocab in one chunk


def _choose_tiling(n_rows, vocab, itemsize, num_cores, vmem_limit):
    # sublane alignment of the row tile depends on the input packing
    align = 8 if itemsize >= 4 else (16 if itemsize == 2 else 32)

    v_chunk = vocab if vocab <= _V_CHUNK_FULL_MAX else _V_CHUNK
    v_steps = _cdiv(vocab, v_chunk)

    # Honest per-row VMEM: double-buffered native-dtype chunk + ~24 B/elem of
    # live f32 chunk temporaries + 128-lane-padded per-row state / tgt / mask.
    per_row = v_chunk * (2 * itemsize + 24) + 4 * 1024
    budget = int(vmem_limit * 0.7)
    max_rows = max(align, (budget // per_row) // align * align)
    max_rows = min(max_rows, 1024)

    rows_per_core = _cdiv(n_rows, max(num_cores, 1))
    want = _cdiv(rows_per_core, align) * align
    row_tile = max(align, min(max_rows, want))

    total_row_blocks = _cdiv(n_rows, row_tile)
    num_cores = max(1, min(num_cores, total_row_blocks))
    row_steps = _cdiv(total_row_blocks, num_cores)
    return row_tile, row_steps, total_row_blocks, num_cores, v_chunk, v_steps


def token_prediction_loss(logits, tgt, tgt_mask, tgt_vocab_size,
                          ignore_index=0, label_smoothing=0.1,
                          denominator=None, ignore_first_token=False):
    """Mirrors TokenPredictionLoss.forward (ignore_first_token=False path)."""
    # TODO(synk): ignore_first_token=True in the reference slices tgt/mask but then
    # reshapes to B*T, which is shape-inconsistent; only the default False path is supported.
    assert not ignore_first_token

    B, T, V = logits.shape
    assert V == tgt_vocab_size
    N = B * T

    flat_logits = logits.reshape(N, V)                  # native dtype, no HBM up-cast
    flat_tgt = tgt.reshape(N, 1).astype(jnp.int32)
    flat_mask = tgt_mask.reshape(N, 1).astype(jnp.float32)

    smoothing_value = label_smoothing / (tgt_vocab_size - 2)
    confidence = 1.0 - label_smoothing
    const_term = 0.0
    if confidence > 0.0:
        const_term += confidence * math.log(confidence)
    if smoothing_value > 0.0:
        const_term += smoothing_value * math.log(smoothing_value) * (tgt_vocab_size - 2)
    lse_coef = confidence + smoothing_value * (tgt_vocab_size - 2)

    # PyTorch one_hot[padding_idx] = 0 uses (possibly negative) wrap-around indexing.
    pad_col = ignore_index if ignore_index >= 0 else ignore_index + V
    assert 0 <= pad_col < V

    num_cores, core_sem = _tc_split()
    vmem_limit = _vmem_limit_bytes()
    itemsize = jnp.dtype(flat_logits.dtype).itemsize
    (row_tile, row_steps, total_row_blocks, num_cores,
     v_chunk, v_steps) = _choose_tiling(N, V, itemsize, num_cores, vmem_limit)
    if num_cores == 1:
        core_sem = "arbitrary"
    if isinstance(core_sem, str):
        dim_sems = (core_sem, "arbitrary", "arbitrary")
    else:
        dim_sems = (core_sem, pltpu.ARBITRARY, pltpu.ARBITRARY)

    def logits_map(c, r, v):
        # Clamp so a trailing block never starts fully out of bounds; the kernel
        # masks duplicated / tail rows by their (unclamped) global row id.
        b = jnp.minimum(c * row_steps + r, total_row_blocks - 1)
        return (b, v)

    def rowvec_map(c, r, v):
        b = jnp.minimum(c * row_steps + r, total_row_blocks - 1)
        return (b, 0)

    kernel = functools.partial(
        _token_loss_kernel,
        n_rows=N, row_tile=row_tile, row_steps=row_steps,
        v_chunk=v_chunk, v_steps=v_steps, vocab_size=V,
        pad_col=pad_col, padding_idx=ignore_index,
        confidence=confidence, smoothing_value=smoothing_value,
        const_term=const_term, lse_coef=lse_coef,
        col_mask_needed=(V % v_chunk != 0))

    out_struct = jax.ShapeDtypeStruct((num_cores, 8, 128), jnp.float32)
    out_spec = pl.BlockSpec((1, 8, 128), lambda c, r, v: (c, 0, 0))

    kl_p, acc_p, msum_p = pl.pallas_call(
        kernel,
        out_shape=(out_struct, out_struct, out_struct),
        grid_spec=pltpu.PrefetchScalarGridSpec(
            num_scalar_prefetch=0,
            grid=(num_cores, row_steps, v_steps),
            in_specs=[
                pl.BlockSpec((row_tile, v_chunk), logits_map),
                pl.BlockSpec((row_tile, 1), rowvec_map),
                pl.BlockSpec((row_tile, 1), rowvec_map),
            ],
            out_specs=[out_spec, out_spec, out_spec],
            scratch_shapes=[
                pltpu.VMEM((row_tile, 1), jnp.float32),   # running max
                pltpu.VMEM((row_tile, 1), jnp.float32),   # running sum-exp
                pltpu.VMEM((row_tile, 1), jnp.float32),   # running weighted logit sum
                pltpu.VMEM((row_tile, 1), jnp.int32),     # running argmax
                pltpu.SMEM((3,), jnp.float32),            # kl / correct / mask totals
            ]),
        compiler_params=pltpu.CompilerParams(
            dimension_semantics=dim_sems,
            vmem_limit_bytes=vmem_limit),
    )(flat_logits, flat_tgt, flat_mask)

    kl_sum = jnp.sum(kl_p[:, 0, 0])
    acc_sum = jnp.sum(acc_p[:, 0, 0])
    mask_sum = jnp.sum(msum_p[:, 0, 0])

    denom = jnp.float32(B) if denominator is None else jnp.float32(denominator)
    token_loss = kl_sum / denom
    word_acc = acc_sum / denom                       # compute_word_accuracy(..., False)
    per_word_accuracy = word_acc * jnp.float32(B) / mask_sum

    return {
        "token_prediction_loss": token_loss,
        "per_word_accuracy": per_word_accuracy,
    }


def _reference(logits, tgt, tgt_mask, V, pad, label_smoothing=0.1, denominator=None):
    """Pure-JAX mirror of the PyTorch module for a correctness check."""
    B, T, _ = logits.shape
    lp = jax.nn.log_softmax(logits.astype(jnp.float32), axis=2).reshape(B * T, V)
    t = tgt.reshape(B * T)
    mask = tgt_mask.reshape(B * T).astype(jnp.float32)
    sv = label_smoothing / (V - 2)
    conf = 1.0 - label_smoothing
    one_hot = jnp.full((V,), sv, jnp.float32).at[pad].set(0.0)
    model_prob = jnp.tile(one_hot[None, :], (B * T, 1))
    model_prob = model_prob.at[jnp.arange(B * T), t].set(conf)
    model_prob = jnp.where((t == pad)[:, None], 0.0, model_prob)
    safe_log = jnp.log(jnp.where(model_prob > 0, model_prob, 1.0))
    kl = jnp.sum(jnp.where(model_prob > 0, model_prob * (safe_log - lp), 0.0))
    denom = jnp.float32(B) if denominator is None else jnp.float32(denominator)
    preds = jnp.argmax(logits, axis=2)
    acc = jnp.sum((preds == tgt).astype(jnp.float32) * tgt_mask) / denom
    return {
        "token_prediction_loss": kl / denom,
        "per_word_accuracy": acc * jnp.float32(B) / jnp.sum(tgt_mask.astype(jnp.float32)),
    }


if __name__ == "__main__":
    key = jax.random.PRNGKey(0)
    B, T, V = 2, 8, 32
    pad_idx = 0   # non-negative padding index (see LabelSmoothingKLDivLoss ignore_index)

    k1, k2 = jax.random.split(key, 2)
    logits = jax.random.normal(k1, (B, T, V), jnp.float32)
    tgt = jax.random.randint(k2, (B, T), 0, V, dtype=jnp.int32)  # 0 acts as padding
    tgt_mask = (tgt != pad_idx).astype(jnp.float32)

    out = token_prediction_loss(logits, tgt, tgt_mask, V, ignore_index=pad_idx)
    out = jax.block_until_ready(out)

    ref = _reference(logits, tgt, tgt_mask, V, pad_idx)
    assert jnp.allclose(out["token_prediction_loss"], ref["token_prediction_loss"],
                        rtol=1e-3, atol=1e-3), (out, ref)
    assert jnp.allclose(out["per_word_accuracy"], ref["per_word_accuracy"],
                        rtol=1e-3, atol=1e-3), (out, ref)

    print("KERNEL_OK")
</pallas_src>

<mosaic_0001>
module attributes {stable_mosaic.version = 11 : i64} {
  func.func @_token_loss_kernel(%arg0: i32, %arg1: i32, %arg2: i32, %arg3: memref<16x32xf32, #tpu.memory_space<vmem>>, %arg4: memref<16x1xi32, #tpu.memory_space<vmem>>, %arg5: memref<16x1xf32, #tpu.memory_space<vmem>>, %arg6: memref<1x8x128xf32, #tpu.memory_space<vmem>>, %arg7: memref<1x8x128xf32, #tpu.memory_space<vmem>>, %arg8: memref<1x8x128xf32, #tpu.memory_space<vmem>>, %arg9: memref<16x1xf32, #tpu.memory_space<vmem>>, %arg10: memref<16x1xf32, #tpu.memory_space<vmem>>, %arg11: memref<16x1xf32, #tpu.memory_space<vmem>>, %arg12: memref<16x1xi32, #tpu.memory_space<vmem>>, %arg13: memref<3xf32, #tpu.memory_space<smem>>) attributes {dimension_semantics = [#tpu.dimension_semantics<arbitrary>, #tpu.dimension_semantics<arbitrary>, #tpu.dimension_semantics<arbitrary>], iteration_bounds = array<i64: 1, 1, 1>, scalar_prefetch = 0 : i64, scratch_operands = 5 : i64, tpu.core_type = #tpu.core_type<tc>, window_params = [{transform_indices = @transform_0, window_bounds = array<i64: 16, 32>}, {transform_indices = @transform_1, window_bounds = array<i64: 16, 1>}, {transform_indices = @transform_2, window_bounds = array<i64: 16, 1>}, {transform_indices = @transform_3, window_bounds = array<i64: 1, 8, 128>}, {transform_indices = @transform_4, window_bounds = array<i64: 1, 8, 128>}, {transform_indices = @transform_5, window_bounds = array<i64: 1, 8, 128>}]} {
    %c0_i32 = arith.constant 0 : i32
    %0 = arith.cmpi eq, %arg1, %c0_i32 : i32
    %c0_i32_0 = arith.constant 0 : i32
    %1 = arith.cmpi eq, %arg2, %c0_i32_0 : i32
    %2 = arith.andi %0, %1 : i1
    %3 = arith.extui %2 : i1 to i32
    %c0_i32_1 = arith.constant 0 : i32
    %4 = arith.cmpi ne, %3, %c0_i32_1 : i32
    scf.if %4 {
      %cst_36 = arith.constant 0.000000e+00 : f32
      %c0_37 = arith.constant 0 : index
      %68 = memref.load %arg13[%c0_37] : memref<3xf32, #tpu.memory_space<smem>>
      memref.store %cst_36, %arg13[%c0_37] : memref<3xf32, #tpu.memory_space<smem>>
      %cst_38 = arith.constant 0.000000e+00 : f32
      %c1 = arith.constant 1 : index
      %69 = memref.load %arg13[%c1] : memref<3xf32, #tpu.memory_space<smem>>
      memref.store %cst_38, %arg13[%c1] : memref<3xf32, #tpu.memory_space<smem>>
      %cst_39 = arith.constant 0.000000e+00 : f32
      %c2 = arith.constant 2 : index
      %70 = memref.load %arg13[%c2] : memref<3xf32, #tpu.memory_space<smem>>
      memref.store %cst_39, %arg13[%c2] : memref<3xf32, #tpu.memory_space<smem>>
    } else {
    }
    %c0_i32_2 = arith.constant 0 : i32
    %5 = arith.cmpi eq, %arg2, %c0_i32_2 : i32
    %6 = arith.extui %5 : i1 to i32
    %c0_i32_3 = arith.constant 0 : i32
    %7 = arith.cmpi ne, %6, %c0_i32_3 : i32
    scf.if %7 {
      %cst_36 = arith.constant 0xFF800000 : f32
      %68 = vector.broadcast %cst_36 : f32 to vector<16x1xf32>
      %c0_37 = arith.constant 0 : index
      %c0_38 = arith.constant 0 : index
      %69 = vector.load %arg9[%c0_37, %c0_38] : memref<16x1xf32, #tpu.memory_space<vmem>>, vector<16x1xf32>
      tpu.vector_store %arg9[%c0_37, %c0_38], %68 {strides = array<i32>} : memref<16x1xf32, #tpu.memory_space<vmem>>, vector<16x1xf32>,
      %cst_39 = arith.constant 0.000000e+00 : f32
      %70 = vector.broadcast %cst_39 : f32 to vector<16x1xf32>
      %c0_40 = arith.constant 0 : index
      %c0_41 = arith.constant 0 : index
      %71 = vector.load %arg10[%c0_40, %c0_41] : memref<16x1xf32, #tpu.memory_space<vmem>>, vector<16x1xf32>
      tpu.vector_store %arg10[%c0_40, %c0_41], %70 {strides = array<i32>} : memref<16x1xf32, #tpu.memory_space<vmem>>, vector<16x1xf32>,
      %cst_42 = arith.constant 0.000000e+00 : f32
      %72 = vector.broadcast %cst_42 : f32 to vector<16x1xf32>
      %c0_43 = arith.constant 0 : index
      %c0_44 = arith.constant 0 : index
      %73 = vector.load %arg11[%c0_43, %c0_44] : memref<16x1xf32, #tpu.memory_space<vmem>>, vector<16x1xf32>
      tpu.vector_store %arg11[%c0_43, %c0_44], %72 {strides = array<i32>} : memref<16x1xf32, #tpu.memory_space<vmem>>, vector<16x1xf32>,
      %c32_i32_45 = arith.constant 32 : i32
      %74 = vector.broadcast %c32_i32_45 : i32 to vector<16x1xi32>
      %c0_46 = arith.constant 0 : index
      %c0_47 = arith.constant 0 : index
      %75 = vector.load %arg12[%c0_46, %c0_47] : memref<16x1xi32, #tpu.memory_space<vmem>>, vector<16x1xi32>
      tpu.vector_store %arg12[%c0_46, %c0_47], %74 {strides = array<i32>} : memref<16x1xi32, #tpu.memory_space<vmem>>, vector<16x1xi32>,
    } else {
    }
    %c0 = arith.constant 0 : index
    %c0_4 = arith.constant 0 : index
    %8 = vector.load %arg3[%c0, %c0_4] : memref<16x32xf32, #tpu.memory_space<vmem>>, vector<16x32xf32>
    %c0_5 = arith.constant 0 : index
    %c0_6 = arith.constant 0 : index
    %9 = vector.load %arg4[%c0_5, %c0_6] : memref<16x1xi32, #tpu.memory_space<vmem>>, vector<16x1xi32>
    %c32_i32 = arith.constant 32 : i32
    %10 = arith.muli %arg2, %c32_i32 : i32
    %11 = tpu.iota {dimensions = array<i32: 1>} : vector<1x32xi32>
    %12 = vector.broadcast %10 : i32 to vector<1x32xi32>
    %13 = arith.addi %12, %11 : vector<1x32xi32>
    %cst = arith.constant dense<0xFF800000> : vector<16xf32>
    %14 = vector.multi_reduction <maximumf>, %8, %cst [1] : vector<16x32xf32> to vector<16xf32>
    %15 = vector.shape_cast %14 : vector<16xf32> to vector<16x1xf32>
    %c0_7 = arith.constant 0 : index
    %c0_8 = arith.constant 0 : index
    %16 = vector.load %arg9[%c0_7, %c0_8] : memref<16x1xf32, #tpu.memory_space<vmem>>, vector<16x1xf32>
    %17 = arith.maximumf %16, %15 : vector<16x1xf32>
    %18 = vector.broadcast %17 : vector<16x1xf32> to vector<16x32xf32>
    %19 = arith.subf %8, %18 : vector<16x32xf32>
    %20 = math.exp %19 : vector<16x32xf32>
    %c0_9 = arith.constant 0 : index
    %c0_10 = arith.constant 0 : index
    %21 = vector.load %arg10[%c0_9, %c0_10] : memref<16x1xf32, #tpu.memory_space<vmem>>, vector<16x1xf32>
    %22 = arith.subf %16, %17 : vector<16x1xf32>
    %23 = math.exp %22 : vector<16x1xf32>
    %24 = arith.mulf %21, %23 : vector<16x1xf32>
    %cst_11 = arith.constant dense<0.000000e+00> : vector<16xf32>
    %25 = vector.multi_reduction <add>, %20, %cst_11 [1] : vector<16x32xf32> to vector<16xf32>
    %26 = vector.shape_cast %25 : vector<16xf32> to vector<16x1xf32>
    %27 = arith.addf %24, %26 : vector<16x1xf32>
    %c0_12 = arith.constant 0 : index
    %c0_13 = arith.constant 0 : index
    %28 = vector.load %arg10[%c0_12, %c0_13] : memref<16x1xf32, #tpu.memory_space<vmem>>, vector<16x1xf32>
    tpu.vector_store %arg10[%c0_12, %c0_13], %27 {strides = array<i32>} : memref<16x1xf32, #tpu.memory_space<vmem>>, vector<16x1xf32>,
    %c0_i32_14 = arith.constant 0 : i32
    %29 = vector.broadcast %c0_i32_14 : i32 to vector<1x32xi32>
    %30 = arith.cmpi eq, %13, %29 : vector<1x32xi32>
    %cst_15 = arith.constant 0.000000e+00 : f32
    %cst_16 = arith.constant -0.00333333341 : f32
    %31 = vector.broadcast %cst_15 : f32 to vector<1x32xf32>
    %32 = vector.broadcast %cst_16 : f32 to vector<1x32xf32>
    %33 = arith.select %30, %31, %32 : vector<1x32xi1>, vector<1x32xf32>
    %34 = vector.broadcast %13 : vector<1x32xi32> to vector<16x32xi32>
    %35 = vector.broadcast %9 : vector<16x1xi32> to vector<16x32xi32>
    %36 = arith.cmpi eq, %34, %35 : vector<16x32xi32>
    %cst_17 = arith.constant -0.899999976 : f32
    %37 = vector.broadcast %cst_17 : f32 to vector<16x32xf32>
    %38 = vector.shape_cast %33 : vector<1x32xf32> to vector<1x32xf32>
    %39 = vector.broadcast %38 : vector<1x32xf32> to vector<16x32xf32>
    %40 = arith.select %36, %37, %39 : vector<16x32xi1>, vector<16x32xf32>
    %41 = arith.mulf %40, %8 : vector<16x32xf32>
    %c0_18 = arith.constant 0 : index
    %c0_19 = arith.constant 0 : index
    %42 = vector.load %arg11[%c0_18, %c0_19] : memref<16x1xf32, #tpu.memory_space<vmem>>, vector<16x1xf32>
    %cst_20 = arith.constant dense<0.000000e+00> : vector<16xf32>
    %43 = vector.multi_reduction <add>, %41, %cst_20 [1] : vector<16x32xf32> to vector<16xf32>
    %44 = vector.shape_cast %43 : vector<16xf32> to vector<16x1xf32>
    %45 = arith.addf %42, %44 : vector<16x1xf32>
    %c0_21 = arith.constant 0 : index
    %c0_22 = arith.constant 0 : index
    %46 = vector.load %arg11[%c0_21, %c0_22] : memref<16x1xf32, #tpu.memory_space<vmem>>, vector<16x1xf32>
    tpu.vector_store %arg11[%c0_21, %c0_22], %45 {strides = array<i32>} : memref<16x1xf32, #tpu.memory_space<vmem>>, vector<16x1xf32>,
    %47 = vector.broadcast %15 : vector<16x1xf32> to vector<16x32xf32>
    %48 = arith.cmpf oeq, %8, %47 : vector<16x32xf32>
    %c32_i32_23 = arith.constant 32 : i32
    %49 = vector.shape_cast %13 : vector<1x32xi32> to vector<1x32xi32>
    %50 = vector.broadcast %49 : vector<1x32xi32> to vector<16x32xi32>
    %51 = vector.broadcast %c32_i32_23 : i32 to vector<16x32xi32>
    %52 = arith.select %48, %50, %51 : vector<16x32xi1>, vector<16x32xi32>
    %cst_24 = arith.constant dense<2147483647> : vector<16xi32>
    %53 = vector.multi_reduction <minsi>, %52, %cst_24 [1] : vector<16x32xi32> to vector<16xi32>
    %54 = vector.shape_cast %53 : vector<16xi32> to vector<16x1xi32>
    %55 = arith.cmpf ogt, %15, %16 : vector<16x1xf32>
    %c0_25 = arith.constant 0 : index
    %c0_26 = arith.constant 0 : index
    %56 = vector.load %arg12[%c0_25, %c0_26] : memref<16x1xi32, #tpu.memory_space<vmem>>, vector<16x1xi32>
    %57 = arith.select %55, %54, %56 : vector<16x1xi1>, vector<16x1xi32>
    %c0_27 = arith.constant 0 : index
    %c0_28 = arith.constant 0 : index
    %58 = vector.load %arg12[%c0_27, %c0_28] : memref<16x1xi32, #tpu.memory_space<vmem>>, vector<16x1xi32>
    tpu.vector_store %arg12[%c0_27, %c0_28], %57 {strides = array<i32>} : memref<16x1xi32, #tpu.memory_space<vmem>>, vector<16x1xi32>,
    %c0_29 = arith.constant 0 : index
    %c0_30 = arith.constant 0 : index
    %59 = vector.load %arg9[%c0_29, %c0_30] : memref<16x1xf32, #tpu.memory_space<vmem>>, vector<16x1xf32>
    tpu.vector_store %arg9[%c0_29, %c0_30], %17 {strides = array<i32>} : memref<16x1xf32, #tpu.memory_space<vmem>>, vector<16x1xf32>,
    %c0_i32_31 = arith.constant 0 : i32
    %60 = arith.cmpi eq, %arg2, %c0_i32_31 : i32
    %61 = arith.extui %60 : i1 to i32
    %c0_i32_32 = arith.constant 0 : i32
    %62 = arith.cmpi ne, %61, %c0_i32_32 : i32
    scf.if %62 {
      %c1_i32 = arith.constant 1 : i32
      %68 = arith.muli %arg0, %c1_i32 : i32
      %69 = arith.addi %68, %arg1 : i32
      %c16_i32 = arith.constant 16 : i32
      %70 = arith.muli %69, %c16_i32 : i32
      %71 = tpu.iota {dimensions = array<i32: 0>} : vector<16x1xi32>
      %72 = vector.broadcast %70 : i32 to vector<16x1xi32>
      %73 = arith.addi %72, %71 : vector<16x1xi32>
      %c16_i32_36 = arith.constant 16 : i32
      %74 = vector.broadcast %c16_i32_36 : i32 to vector<16x1xi32>
      %75 = arith.cmpi slt, %73, %74 : vector<16x1xi32>
      %c0_37 = arith.constant 0 : index
      %c0_38 = arith.constant 0 : index
      %76 = vector.load %arg5[%c0_37, %c0_38] : memref<16x1xf32, #tpu.memory_space<vmem>>, vector<16x1xf32>
      %cst_39 = arith.constant 0.000000e+00 : f32
      %77 = vector.broadcast %cst_39 : f32 to vector<16x1xf32>
      %78 = arith.select %75, %76, %77 : vector<16x1xi1>, vector<16x1xf32>
      %c0_40 = arith.constant 0 : index
      %c0_41 = arith.constant 0 : index
      %79 = vector.load %arg9[%c0_40, %c0_41] : memref<16x1xf32, #tpu.memory_space<vmem>>, vector<16x1xf32>
      %c0_42 = arith.constant 0 : index
      %c0_43 = arith.constant 0 : index
      %80 = vector.load %arg10[%c0_42, %c0_43] : memref<16x1xf32, #tpu.memory_space<vmem>>, vector<16x1xf32>
      %81 = math.log %80 : vector<16x1xf32>
      %82 = arith.addf %79, %81 : vector<16x1xf32>
      %c0_44 = arith.constant 0 : index
      %c0_45 = arith.constant 0 : index
      %83 = vector.load %arg11[%c0_44, %c0_45] : memref<16x1xf32, #tpu.memory_space<vmem>>, vector<16x1xf32>
      %cst_46 = arith.constant -0.665202737 : f32
      %84 = vector.broadcast %cst_46 : f32 to vector<16x1xf32>
      %85 = arith.addf %84, %83 : vector<16x1xf32>
      %cst_47 = arith.constant 1.000000e+00 : f32
      %86 = vector.broadcast %cst_47 : f32 to vector<16x1xf32>
      %87 = arith.mulf %86, %82 : vector<16x1xf32>
      %88 = arith.addf %85, %87 : vector<16x1xf32>
      %c0_i32_48 = arith.constant 0 : i32
      %89 = vector.broadcast %c0_i32_48 : i32 to vector<16x1xi32>
      %90 = arith.cmpi ne, %9, %89 : vector<16x1xi32>
      %91 = arith.andi %75, %90 : vector<16x1xi1>
      %cst_49 = arith.constant 0.000000e+00 : f32
      %92 = vector.broadcast %cst_49 : f32 to vector<16x1xf32>
      %93 = arith.select %91, %88, %92 : vector<16x1xi1>, vector<16x1xf32>
      %c0_50 = arith.constant 0 : index
      %c0_51 = arith.constant 0 : index
      %94 = vector.load %arg12[%c0_50, %c0_51] : memref<16x1xi32, #tpu.memory_space<vmem>>, vector<16x1xi32>
      %95 = arith.cmpi eq, %94, %9 : vector<16x1xi32>
      %cst_52 = arith.constant 0.000000e+00 : f32
      %96 = vector.broadcast %cst_52 : f32 to vector<16x1xf32>
      %97 = arith.select %95, %78, %96 : vector<16x1xi1>, vector<16x1xf32>
      %c0_53 = arith.constant 0 : index
      %98 = memref.load %arg13[%c0_53] : memref<3xf32, #tpu.memory_space<smem>>
      %99 = vector.shape_cast %93 : vector<16x1xf32> to vector<1x16x1xf32>
      %cst_54 = arith.constant dense<0.000000e+00> : vector<1xf32>
      %100 = vector.multi_reduction <add>, %99, %cst_54 [1, 2] : vector<1x16x1xf32> to vector<1xf32>
      %101 = vector.shape_cast %100 : vector<1xf32> to vector<1x1x1xf32>
      %102 = vector.extract %101[0, 0, 0] : f32 from vector<1x1x1xf32>
      %103 = arith.addf %98, %102 : f32
      %c0_55 = arith.constant 0 : index
      %104 = memref.load %arg13[%c0_55] : memref<3xf32, #tpu.memory_space<smem>>
      memref.store %103, %arg13[%c0_55] : memref<3xf32, #tpu.memory_space<smem>>
      %c1 = arith.constant 1 : index
      %105 = memref.load %arg13[%c1] : memref<3xf32, #tpu.memory_space<smem>>
      %106 = vector.shape_cast %97 : vector<16x1xf32> to vector<1x16x1xf32>
      %cst_56 = arith.constant dense<0.000000e+00> : vector<1xf32>
      %107 = vector.multi_reduction <add>, %106, %cst_56 [1, 2] : vector<1x16x1xf32> to vector<1xf32>
      %108 = vector.shape_cast %107 : vector<1xf32> to vector<1x1x1xf32>
      %109 = vector.extract %108[0, 0, 0] : f32 from vector<1x1x1xf32>
      %110 = arith.addf %105, %109 : f32
      %c1_57 = arith.constant 1 : index
      %111 = memref.load %arg13[%c1_57] : memref<3xf32, #tpu.memory_space<smem>>
      memref.store %110, %arg13[%c1_57] : memref<3xf32, #tpu.memory_space<smem>>
      %c2 = arith.constant 2 : index
      %112 = memref.load %arg13[%c2] : memref<3xf32, #tpu.memory_space<smem>>
      %113 = vector.shape_cast %78 : vector<16x1xf32> to vector<1x16x1xf32>
      %cst_58 = arith.constant dense<0.000000e+00> : vector<1xf32>
      %114 = vector.multi_reduction <add>, %113, %cst_58 [1, 2] : vector<1x16x1xf32> to vector<1xf32>
      %115 = vector.shape_cast %114 : vector<1xf32> to vector<1x1x1xf32>
      %116 = vector.extract %115[0, 0, 0] : f32 from vector<1x1x1xf32>
      %117 = arith.addf %112, %116 : f32
      %c2_59 = arith.constant 2 : index
      %118 = memref.load %arg13[%c2_59] : memref<3xf32, #tpu.memory_space<smem>>
      memref.store %117, %arg13[%c2_59] : memref<3xf32, #tpu.memory_space<smem>>
    } else {
    }
    %c0_i32_33 = arith.constant 0 : i32
    %63 = arith.cmpi eq, %arg1, %c0_i32_33 : i32
    %c0_i32_34 = arith.constant 0 : i32
    %64 = arith.cmpi eq, %arg2, %c0_i32_34 : i32
    %65 = arith.andi %63, %64 : i1
    %66 = arith.extui %65 : i1 to i32
    %c0_i32_35 = arith.constant 0 : i32
    %67 = arith.cmpi ne, %66, %c0_i32_35 : i32
    scf.if %67 {
      %c0_36 = arith.constant 0 : index
      %68 = memref.load %arg13[%c0_36] : memref<3xf32, #tpu.memory_space<smem>>
      %69 = vector.broadcast %68 : f32 to vector<1x8x128xf32>
      %c0_37 = arith.constant 0 : index
      %c0_38 = arith.constant 0 : index
      %c0_39 = arith.constant 0 : index
      %70 = vector.load %arg6[%c0_37, %c0_38, %c0_39] : memref<1x8x128xf32, #tpu.memory_space<vmem>>, vector<1x8x128xf32>
      tpu.vector_store %arg6[%c0_37, %c0_38, %c0_39], %69 {strides = array<i32>} : memref<1x8x128xf32, #tpu.memory_space<vmem>>, vector<1x8x128xf32>,
      %c1 = arith.constant 1 : index
      %71 = memref.load %arg13[%c1] : memref<3xf32, #tpu.memory_space<smem>>
      %72 = vector.broadcast %71 : f32 to vector<1x8x128xf32>
      %c0_40 = arith.constant 0 : index
      %c0_41 = arith.constant 0 : index
      %c0_42 = arith.constant 0 : index
      %73 = vector.load %arg7[%c0_40, %c0_41, %c0_42] : memref<1x8x128xf32, #tpu.memory_space<vmem>>, vector<1x8x128xf32>
      tpu.vector_store %arg7[%c0_40, %c0_41, %c0_42], %72 {strides = array<i32>} : memref<1x8x128xf32, #tpu.memory_space<vmem>>, vector<1x8x128xf32>,
      %c2 = arith.constant 2 : index
      %74 = memref.load %arg13[%c2] : memref<3xf32, #tpu.memory_space<smem>>
      %75 = vector.broadcast %74 : f32 to vector<1x8x128xf32>
      %c0_43 = arith.constant 0 : index
      %c0_44 = arith.constant 0 : index
      %c0_45 = arith.constant 0 : index
      %76 = vector.load %arg8[%c0_43, %c0_44, %c0_45] : memref<1x8x128xf32, #tpu.memory_space<vmem>>, vector<1x8x128xf32>
      tpu.vector_store %arg8[%c0_43, %c0_44, %c0_45], %75 {strides = array<i32>} : memref<1x8x128xf32, #tpu.memory_space<vmem>>, vector<1x8x128xf32>,
    } else {
    }
    return
  }
  func.func @transform_0(%arg0: i32, %arg1: i32, %arg2: i32) -> (i32, i32) {
    %c1_i32 = arith.constant 1 : i32
    %0 = arith.muli %arg0, %c1_i32 : i32
    %1 = arith.addi %0, %arg1 : i32
    %c0_i32 = arith.constant 0 : i32
    %2 = arith.minsi %1, %c0_i32 : i32
    %c0_i32_0 = arith.constant 0 : i32
    return %2, %arg2 : i32, i32
  }
  func.func @transform_1(%arg0: i32, %arg1: i32, %arg2: i32) -> (i32, i32) {
    %c1_i32 = arith.constant 1 : i32
    %0 = arith.muli %arg0, %c1_i32 : i32
    %1 = arith.addi %0, %arg1 : i32
    %c0_i32 = arith.constant 0 : i32
    %2 = arith.minsi %1, %c0_i32 : i32
    %c0_i32_0 = arith.constant 0 : i32
    %c0_i32_1 = arith.constant 0 : i32
    return %2, %c0_i32_0 : i32, i32
  }
  func.func @transform_2(%arg0: i32, %arg1: i32, %arg2: i32) -> (i32, i32) {
    %c1_i32 = arith.constant 1 : i32
    %0 = arith.muli %arg0, %c1_i32 : i32
    %1 = arith.addi %0, %arg1 : i32
    %c0_i32 = arith.constant 0 : i32
    %2 = arith.minsi %1, %c0_i32 : i32
    %c0_i32_0 = arith.constant 0 : i32
    %c0_i32_1 = arith.constant 0 : i32
    return %2, %c0_i32_0 : i32, i32
  }
  func.func @transform_3(%arg0: i32, %arg1: i32, %arg2: i32) -> (i32, i32, i32) {
    %c0_i32 = arith.constant 0 : i32
    %c0_i32_0 = arith.constant 0 : i32
    %c0_i32_1 = arith.constant 0 : i32
    return %arg0, %c0_i32, %c0_i32_0 : i32, i32, i32
  }
  func.func @transform_4(%arg0: i32, %arg1: i32, %arg2: i32) -> (i32, i32, i32) {
    %c0_i32 = arith.constant 0 : i32
    %c0_i32_0 = arith.constant 0 : i32
    %c0_i32_1 = arith.constant 0 : i32
    return %arg0, %c0_i32, %c0_i32_0 : i32, i32, i32
  }
  func.func @transform_5(%arg0: i32, %arg1: i32, %arg2: i32) -> (i32, i32, i32) {
    %c0_i32 = arith.constant 0 : i32
    %c0_i32_0 = arith.constant 0 : i32
    %c0_i32_1 = arith.constant 0 : i32
    return %arg0, %c0_i32, %c0_i32_0 : i32, i32, i32
  }
}

</mosaic_0001>

<llo_original>
// kernel: tpu_custom_call.1
$region0: #{tpu_custom_call.1}
  #allocation0 [shape = 'u32[]', space=smem, size = 0x4, offset = 0x4, fixed_abs, tag = 'smem constant byte address 0x4 - core index']
  #allocation1 [shape = 'u32[144,128]{1,0:T(1,128)}', space=vmem, size = 0x12000, scoped, tag = 'internal scratch']
  #allocation2 [shape = 'f32[16,1]{1,0:T(8,128)}', space=vmem, size = 0x2000, scoped, tag = 'scratch operand']
  #allocation3 [shape = 'f32[16,1]{1,0:T(8,128)}', space=vmem, size = 0x2000, scoped, tag = 'scratch operand']
  #allocation4 [shape = 'f32[16,1]{1,0:T(8,128)}', space=vmem, size = 0x2000, scoped, tag = 'scratch operand']
  #allocation5 [shape = 's32[16,1]{1,0:T(8,128)}', space=vmem, size = 0x2000, scoped, tag = 'scratch operand']
  #allocation6 [shape = 'f32[3]{0:T(128)}', space=smem, size = 0x200, scoped, tag = 'scratch operand']
  %s0 = inlined_call_operand.vmem [shape: f32[16,32], index: 0, kind: input, shape index: {}]
  %s1 = inlined_call_operand.vmem [shape: s32[16,1], index: 1, kind: input, shape index: {}]
  %s2 = inlined_call_operand.vmem [shape: f32[16,1], index: 2, kind: input, shape index: {}]
  %s3 = inlined_call_operand.hbm [shape: f32[1,8,128], index: 3, kind: output, shape index: {0}]
  %s4 = inlined_call_operand.hbm [shape: f32[1,8,128], index: 4, kind: output, shape index: {1}]
  %s5 = inlined_call_operand.hbm [shape: f32[1,8,128], index: 5, kind: output, shape index: {2}]
  %6 = xla_tuple %s3, %s4, %s5
  %s7 = sld [smem:[#allocation0]]
  $region54: #{tpu_custom_call.1} parent=0
    _
  %s9 = ssub.s32 1, %s7
  %s10 = scalar_select 0, %s9, %s7
  $region1: #{tpu_custom_call.1} parent=0
    #allocation7 [shape = 'u8[4096]{0}', space=vmem, size = 0x1000, scoped, tag = 'output window, operand 0, single buffered']
    #allocation8 [shape = 's32[1]{0}', space=sflag, size = 0x4, scoped, tag = 'scoped memory for tpu_custom_call.1']
    #allocation9 [shape = 'u8[4096]{0}', space=vmem, size = 0x1000, scoped, tag = 'output window, operand 1, single buffered']
    #allocation10 [shape = 's32[1]{0}', space=sflag, size = 0x4, scoped, tag = 'scoped memory for tpu_custom_call.1']
    #allocation11 [shape = 'u8[4096]{0}', space=vmem, size = 0x1000, scoped, tag = 'output window, operand 2, single buffered']
    %11 = vsyncpa [#allocation8], 0
    %12 = vsyncpa [#allocation10], 0
    // Predicated region
    $region2: #{tpu_custom_call.1} parent=1 // pred_check
      _
    $region3: #{tpu_custom_call.1} parent=1 // pred_check_branch
      %14 = sbr.rel (0) target = $region5
    $region4: #{tpu_custom_call.1} parent=1 // pred_region
      %s15 = sadd.s32 0, 0
      %p16 = scmp.lt.s32.totalorder %s15, 0
      %s17 = scalar_select %p16, %s15, 0
      %s18 = smul.u32 2, %s17
      %p19 = scmp.lt.s32.totalorder %s18, 1
      %s20 = scalar_select %p19, %s18, 1
      %s21 = smul.addr %s20, 8
      %s22 = scalar_lea.vmem %s0, %s21
      %s23 = sadd.s32 0, 0
      %p24 = scmp.lt.s32.totalorder %s23, 0
      %s25 = scalar_select %p24, %s23, 0
      %s26 = smul.u32 2, %s25
    $region5: #{tpu_custom_call.1} parent=1 // pred_fallthru
      _
    // Predicated region
    $region6: #{tpu_custom_call.1} parent=1 // pred_check
      _
    $region7: #{tpu_custom_call.1} parent=1 // pred_check_branch
      %28 = sbr.rel (0) target = $region9
    $region8: #{tpu_custom_call.1} parent=1 // pred_region
      %s29 = sadd.s32 0, 0
      %p30 = scmp.lt.s32.totalorder %s29, 0
      %s31 = scalar_select %p30, %s29, 0
      %s32 = smul.u32 2, %s31
      %p33 = scmp.lt.s32.totalorder %s32, 1
      %s34 = scalar_select %p33, %s32, 1
      %s35 = smul.addr %s34, 8
      %s36 = scalar_lea.vmem %s1, %s35
      %s37 = sadd.s32 0, 0
      %p38 = scmp.lt.s32.totalorder %s37, 0
      %s39 = scalar_select %p38, %s37, 0
      %s40 = smul.u32 2, %s39
    $region9: #{tpu_custom_call.1} parent=1 // pred_fallthru
      _
    // Predicated region
    $region10: #{tpu_custom_call.1} parent=1 // pred_check
      _
    $region11: #{tpu_custom_call.1} parent=1 // pred_check_branch
      %42 = sbr.rel (0) target = $region13
    $region12: #{tpu_custom_call.1} parent=1 // pred_region
      %s43 = sadd.s32 0, 0
      %p44 = scmp.lt.s32.totalorder %s43, 0
      %s45 = scalar_select %p44, %s43, 0
      %s46 = smul.u32 2, %s45
      %p47 = scmp.lt.s32.totalorder %s46, 1
      %s48 = scalar_select %p47, %s46, 1
      %s49 = smul.addr %s48, 8
      %s50 = scalar_lea.vmem %s2, %s49
      %s51 = sadd.s32 0, 0
      %p52 = scmp.lt.s32.totalorder %s51, 0
      %s53 = scalar_select %p52, %s51, 0
      %s54 = smul.u32 2, %s53
    $region13: #{tpu_custom_call.1} parent=1 // pred_fallthru
      _
    %s55 = sadd.s32 0, 0
    %p56 = scmp.lt.s32.totalorder %s55, 0
    %s57 = scalar_select %p56, %s55, 0
    %s58 = smul.u32 2, %s57
    %p59 = scmp.lt.s32.totalorder %s58, 1
    %s60 = scalar_select %p59, %s58, 1
    %s61 = smul.addr %s60, 8
    %s62 = scalar_lea.vmem %s0, %s61
    %s63 = sadd.s32 0, 0
    %p64 = scmp.lt.s32.totalorder %s63, 0
    %s65 = scalar_select %p64, %s63, 0
    %s66 = smul.u32 2, %s65
    %p67 = scmp.lt.s32.totalorder %s66, 1
    %s68 = scalar_select %p67, %s66, 1
    %s69 = smul.addr %s68, 8
    %s70 = scalar_lea.vmem %s1, %s69
    %s71 = sadd.s32 0, 0
    %p72 = scmp.lt.s32.totalorder %s71, 0
    %s73 = scalar_select %p72, %s71, 0
    %s74 = smul.u32 2, %s73
    %p75 = scmp.lt.s32.totalorder %s74, 1
    %s76 = scalar_select %p75, %s74, 1
    %s77 = smul.addr %s76, 8
    %s78 = scalar_lea.vmem %s2, %s77
    %s79 = sadd.s32 0, 0
    %p80 = scmp.lt.s32.totalorder %s79, 0
    %s81 = scalar_select %p80, %s79, 0
    %s82 = smul.u32 2, %s81
    %p83 = scmp.lt.s32.totalorder %s82, 1
    %s84 = scalar_select %p83, %s82, 1
    %s85 = smul.addr %s84, 8
    %s86 = scalar_lea.vmem %s0, %s85
    %s87 = sadd.s32 0, 0
    %p88 = scmp.lt.s32.totalorder %s87, 0
    %s89 = scalar_select %p88, %s87, 0
    %s90 = smul.u32 2, %s89
    %s91 = sadd.s32 0, 0
    %p92 = scmp.lt.s32.totalorder %s91, 0
    %s93 = scalar_select %p92, %s91, 0
    %s94 = smul.u32 2, %s93
    %p95 = scmp.lt.s32.totalorder %s94, 1
    %s96 = scalar_select %p95, %s94, 1
    %s97 = smul.addr %s96, 8
    %s98 = scalar_lea.vmem %s1, %s97
    %s99 = sadd.s32 0, 0
    %p100 = scmp.lt.s32.totalorder %s99, 0
    %s101 = scalar_select %p100, %s99, 0
    %s102 = smul.u32 2, %s101
    %s103 = sadd.s32 0, 0
    %p104 = scmp.lt.s32.totalorder %s103, 0
    %s105 = scalar_select %p104, %s103, 0
    %s106 = smul.u32 2, %s105
    %p107 = scmp.lt.s32.totalorder %s106, 1
    %s108 = scalar_select %p107, %s106, 1
    %s109 = smul.addr %s108, 8
    %s110 = scalar_lea.vmem %s2, %s109
    %s111 = sadd.s32 0, 0
    %p112 = scmp.lt.s32.totalorder %s111, 0
    %s113 = scalar_select %p112, %s111, 0
    %s114 = smul.u32 2, %s113
    %p115 = scmp.eq.s32.totalorder 0, 0
    %p116 = scmp.eq.s32.totalorder 0, 0
    %p117 = pnand %p115, %p116
    %p118 = pneg %p117
    // Predicated region
    $region14: #{tpu_custom_call.1} parent=1 // pred_check
      _
    $region15: #{tpu_custom_call.1} parent=1 // pred_check_branch
      %120 = sbr.rel (%p117) target = $region17
    $region16: #{tpu_custom_call.1} parent=1 // pred_region
      %s121 = scalar_lea.smem [#allocation6], 0
      %122 = sst [smem:[%s121]] 0.0
      %s123 = scalar_lea.smem [#allocation6], 1
      %124 = sst [smem:[%s123]] 0.0
      %s125 = scalar_lea.smem [#allocation6], 2
      %126 = sst [smem:[%s125]] 0.0
    $region17: #{tpu_custom_call.1} parent=1 // pred_fallthru
      _
    // Predicated region
    $region18: #{tpu_custom_call.1} parent=1 // pred_check
      %p127 = pneg %p116
    $region19: #{tpu_custom_call.1} parent=1 // pred_check_branch
      %129 = sbr.rel (%p127) target = $region21
    $region20: #{tpu_custom_call.1} parent=1 // pred_region
      %vm130 = vcmask 7168
      %131 = vst.msk [vmem:[#allocation2] sm:$0xff] %vm130, -inf
      %132 = vst.msk [vmem:[#allocation2 + $0x8] sm:$0xff] %vm130, -inf
      %133 = vst.msk [vmem:[#allocation3] sm:$0xff] %vm130, 0.0
      %134 = vst.msk [vmem:[#allocation3 + $0x8] sm:$0xff] %vm130, 0.0
      %135 = vst.msk [vmem:[#allocation4] sm:$0xff] %vm130, 0.0
      %136 = vst.msk [vmem:[#allocation4 + $0x8] sm:$0xff] %vm130, 0.0
      %137 = vst.msk [vmem:[#allocation5] sm:$0xff] %vm130, 32
      %138 = vst.msk [vmem:[#allocation5 + $0x8] sm:$0xff] %vm130, 32
    $region21: #{tpu_custom_call.1} parent=1 // pred_fallthru
      _
    %v139 = vld [vmem:[%s86] sm:$0xff]
    %v140 = vld [vmem:[%s86 + $0x8] sm:$0xff]
    %v141 = vld [vmem:[%s98] sm:$0xff]
    %v142 = vld [vmem:[%s98 + $0x8] sm:$0xff]
    %s143 = smul.u32 0, 32
    %v144 = vlaneseq
    %v145 = vand.u32 %v144, 127
    %v146 = vstv %s143
    %v147 = vadd.s32 %v146, %v145
    %vm148 = vcmask 261120
    %v149 = vsel %vm148, %v139, -inf
    %150 = vmax.xlane.f32.xlu0 %v149
    %v151 = vpop.xlane.xlu0 %150
    %v152 = vsel %vm148, %v140, -inf
    %153 = vmax.xlane.f32.xlu0 %v152
    %v154 = vpop.xlane.xlu0 %153
    %v155 = vld [vmem:[#allocation2] sm:$0xff]
    %v156 = vld [vmem:[#allocation2 + $0x8] sm:$0xff]
    %v157 = vmax.f32 %v155, %v151
    %v158 = vmax.f32 %v156, %v154
    %160 = vset.pattern.permute.xlu0 0
    %161 = vperm.xlu0 %160, %v157
    %v162 = vpop.permute.xlu0 %161
    %165 = vset.pattern.permute.xlu0 0
    %166 = vperm.xlu0 %165, %v158
    %v167 = vpop.permute.xlu0 %166
    %v169 = vsub.f32 %v139, %v162
    %v170 = vsub.f32 %v140, %v167
    %v171 = vmul.f32 %v169, 1.442695
    %v172 = vpow.pop %v171
    %v173 = vmul.f32 %v170, 1.442695
    %v174 = vpow.pop %v173
    %v175 = vld [vmem:[#allocation3] sm:$0xff]
    %v176 = vld [vmem:[#allocation3 + $0x8] sm:$0xff]
    %v177 = vsub.f32 %v155, %v157
    %v178 = vsub.f32 %v156, %v158
    %v179 = vmul.f32 %v177, 1.442695
    %v180 = vpow.pop %v179
    %v181 = vmul.f32 %v178, 1.442695
    %v182 = vpow.pop %v181
    %v183 = vmul.f32 %v175, %v180
    %v184 = vmul.f32 %v176, %v182
    %v185 = vsel %vm148, %v172, 0.0
    %186 = vadd.xlane.f32.xlu0 %v185
    %v187 = vpop.xlane.xlu0 %186
    %v188 = vsel %vm148, %v174, 0.0
    %189 = vadd.xlane.f32.xlu0 %v188
    %v190 = vpop.xlane.xlu0 %189
    %v191 = vadd.f32 %v183, %v187
    %v192 = vadd.f32 %v184, %v190
    %vm193 = vcmask 7168
    %194 = vst.msk [vmem:[#allocation3] sm:$0xff] %vm193, %v191
    %195 = vst.msk [vmem:[#allocation3 + $0x8] sm:$0xff] %vm193, %v192
    %vm196 = vcmp.eq.s32.totalorder %v147, 0
    %v197 = vsel %vm196, 0.0, -0.0033333334
    %198 = vset.pattern.permute.xlu0 0
    %199 = vperm.xlu0 %198, %v141
    %v200 = vpop.permute.xlu0 %199
    %201 = vset.pattern.permute.xlu0 0
    %202 = vperm.xlu0 %201, %v142
    %v203 = vpop.permute.xlu0 %202
    %vm204 = vcmp.eq.s32.totalorder %v147, %v200
    %vm205 = vcmp.eq.s32.totalorder %v147, %v203
    %v206 = vsel %vm204, -0.9, %v197
    %v207 = vsel %vm205, -0.9, %v197
    %v208 = vmul.f32 %v206, %v139
    %v209 = vmul.f32 %v207, %v140
    %v210 = vld [vmem:[#allocation4] sm:$0xff]
    %v211 = vld [vmem:[#allocation4 + $0x8] sm:$0xff]
    %v212 = vsel %vm148, %v208, 0.0
    %213 = vadd.xlane.f32.xlu0 %v212
    %v214 = vpop.xlane.xlu0 %213
    %v215 = vsel %vm148, %v209, 0.0
    %216 = vadd.xlane.f32.xlu0 %v215
    %v217 = vpop.xlane.xlu0 %216
    %v218 = vadd.f32 %v210, %v214
    %v219 = vadd.f32 %v211, %v217
    %220 = vst.msk [vmem:[#allocation4] sm:$0xff] %vm193, %v218
    %221 = vst.msk [vmem:[#allocation4 + $0x8] sm:$0xff] %vm193, %v219
    %vm222 = vcmp.eq.f32.partialorder %v139, %v151
    %vm223 = vcmp.eq.f32.partialorder %v140, %v154
    %v224 = vsel %vm222, %v147, 32
    %v225 = vsel %vm223, %v147, 32
    %v226 = vsel %vm148, %v224, 2147483647
    %v227 = vand.u32 %v226, 65535
    %v228 = vshra.s32 %v226, 16
    %v229 = vcvt.s32.f32 %v227
    %v230 = vcvt.s32.f32 %v228
    %231 = vmin.xlane.f32.xlu0 %v230
    %v232 = vpop.xlane.xlu0 %231
    %vm233 = vcmp.eq.f32.partialorder %v230, %v232
    %v234 = vsel %vm233, %v229, inf
    %235 = vmin.xlane.f32.xlu0 %v234
    %v236 = vpop.xlane.xlu0 %235
    %v237 = vcvt.f32.s32 %v236
    %v238 = vcvt.f32.s32 %v232
    %v239 = vshll.u32 %v238, 16
    %v240 = vadd.s32 %v239, %v237
    %v241 = vsel %vm148, %v225, 2147483647
    %v242 = vand.u32 %v241, 65535
    %v243 = vshra.s32 %v241, 16
    %v244 = vcvt.s32.f32 %v242
    %v245 = vcvt.s32.f32 %v243
    %246 = vmin.xlane.f32.xlu0 %v245
    %v247 = vpop.xlane.xlu0 %246
    %vm248 = vcmp.eq.f32.partialorder %v245, %v247
    %v249 = vsel %vm248, %v244, inf
    %250 = vmin.xlane.f32.xlu0 %v249
    %v251 = vpop.xlane.xlu0 %250
    %v252 = vcvt.f32.s32 %v251
    %v253 = vcvt.f32.s32 %v247
    %v254 = vshll.u32 %v253, 16
    %v255 = vadd.s32 %v254, %v252
    %vm256 = vcmp.gt.f32.partialorder %v151, %v155
    %vm257 = vcmp.gt.f32.partialorder %v154, %v156
    %v258 = vld [vmem:[#allocation5] sm:$0xff]
    %v259 = vld [vmem:[#allocation5 + $0x8] sm:$0xff]
    %v260 = vsel %vm256, %v240, %v258
    %v261 = vsel %vm257, %v255, %v259
    %262 = vst.msk [vmem:[#allocation5] sm:$0xff] %vm193, %v260
    %263 = vst.msk [vmem:[#allocation5 + $0x8] sm:$0xff] %vm193, %v261
    %264 = vst.msk [vmem:[#allocation2] sm:$0xff] %vm193, %v157
    %265 = vst.msk [vmem:[#allocation2 + $0x8] sm:$0xff] %vm193, %v158
    // Predicated region
    $region22: #{tpu_custom_call.1} parent=1 // pred_check
      %p266 = pneg %p116
    $region23: #{tpu_custom_call.1} parent=1 // pred_check_branch
      %268 = sbr.rel (%p266) target = $region25
    $region24: #{tpu_custom_call.1} parent=1 // pred_region
      %s269 = sadd.s32 0, 0
      %s270 = smul.u32 %s269, 16
      %v271 = vlaneseq
      %v272 = vshrl.u32 %v271, 7
      %v273 = vadd.s32 %v272, 8
      %v274 = vstv %s270
      %v275 = vadd.s32 %v274, %v272
      %v276 = vadd.s32 %v274, %v273
      %vm277 = vcmp.lt.s32.totalorder %v275, 16
      %vm278 = vcmp.lt.s32.totalorder %v276, 16
      %v279 = vld [vmem:[%s110] sm:$0xff]
      %v280 = vld [vmem:[%s110 + $0x8] sm:$0xff]
      %v281 = vsel %vm277, %v279, 0.0
      %v282 = vsel %vm278, %v280, 0.0
      %v283 = vld [vmem:[#allocation2] sm:$0xff]
      %v284 = vld [vmem:[#allocation2 + $0x8] sm:$0xff]
      %v285 = vld [vmem:[#allocation3] sm:$0xff]
      %v286 = vld [vmem:[#allocation3 + $0x8] sm:$0xff]
      %v287 = vlog2.pop %v285
      %v288 = vmul.f32 %v287, 0.6931472
      %v289 = vlog2.pop %v286
      %v290 = vmul.f32 %v289, 0.6931472
      %v291 = vadd.f32 %v283, %v288
      %v292 = vadd.f32 %v284, %v290
      %v293 = vld [vmem:[#allocation4] sm:$0xff]
      %v294 = vld [vmem:[#allocation4 + $0x8] sm:$0xff]
      %v295 = vadd.f32 %v293, -0.66520274
      %v296 = vadd.f32 %v294, -0.66520274
      %v297 = vadd.f32 %v295, %v291
      %v298 = vadd.f32 %v296, %v292
      %vm299 = vcmp.ne.s32.totalorder %v141, 0
      %vm300 = vcmp.ne.s32.totalorder %v142, 0
      %vm301 = vmand %vm277, %vm299
      %vm302 = vmand %vm278, %vm300
      %v303 = vsel %vm301, %v297, 0.0
      %v304 = vsel %vm302, %v298, 0.0
      %v305 = vld [vmem:[#allocation5] sm:$0xff]
      %v306 = vld [vmem:[#allocation5 + $0x8] sm:$0xff]
      %vm307 = vcmp.eq.s32.totalorder %v305, %v141
      %vm308 = vcmp.eq.s32.totalorder %v306, %v142
      %v309 = vsel %vm307, %v281, 0.0
      %v310 = vsel %vm308, %v282, 0.0
      %s311 = sld [smem:[#allocation6]]
      %v312 = vsel %vm193, %v303, 0.0
      %v313 = vsel %vm193, %v304, 0.0
      %v314 = vadd.f32 %v312, %v313
      %315 = vadd.xlane.f32.xlu0 %v314
      %v316 = vpop.xlane.xlu0 %315
      %v317 = vrot.slane %v316, 4
      %v318 = vadd.f32 %v316, %v317
      %v319 = vrot.slane %v318, 2
      %v320 = vadd.f32 %v318, %v319
      %v321 = vrot.slane %v320, 1
      %v322 = vadd.f32 %v320, %v321
      %s323 = vtos %v322
      %s324 = sadd.f32 %s311, %s323
      %s325 = scalar_lea.smem [#allocation6], 0
      %326 = sst [smem:[%s325]] %s324
      %s327 = sld [smem:[#allocation6 + $0x1]]
      %v328 = vsel %vm193, %v309, 0.0
      %v329 = vsel %vm193, %v310, 0.0
      %v330 = vadd.f32 %v328, %v329
      %331 = vadd.xlane.f32.xlu0 %v330
      %v332 = vpop.xlane.xlu0 %331
      %v333 = vrot.slane %v332, 4
      %v334 = vadd.f32 %v332, %v333
      %v335 = vrot.slane %v334, 2
      %v336 = vadd.f32 %v334, %v335
      %v337 = vrot.slane %v336, 1
      %v338 = vadd.f32 %v336, %v337
      %s339 = vtos %v338
      %s340 = sadd.f32 %s327, %s339
      %s341 = scalar_lea.smem [#allocation6], 1
      %342 = sst [smem:[%s341]] %s340
      %s343 = sld [smem:[#allocation6 + $0x2]]
      %v344 = vsel %vm193, %v281, 0.0
      %v345 = vsel %vm193, %v282, 0.0
      %v346 = vadd.f32 %v344, %v345
      %347 = vadd.xlane.f32.xlu0 %v346
      %v348 = vpop.xlane.xlu0 %347
      %v349 = vrot.slane %v348, 4
      %v350 = vadd.f32 %v348, %v349
      %v351 = vrot.slane %v350, 2
      %v352 = vadd.f32 %v350, %v351
      %v353 = vrot.slane %v352, 1
      %v354 = vadd.f32 %v352, %v353
      %s355 = vtos %v354
      %s356 = sadd.f32 %s343, %s355
      %s357 = scalar_lea.smem [#allocation6], 2
      %358 = sst [smem:[%s357]] %s356
    $region25: #{tpu_custom_call.1} parent=1 // pred_fallthru
      _
    // Predicated region
    $region26: #{tpu_custom_call.1} parent=1 // pred_check
      _
    $region27: #{tpu_custom_call.1} parent=1 // pred_check_branch
      %360 = sbr.rel (%p117) target = $region29
    $region28: #{tpu_custom_call.1} parent=1 // pred_region
      %s361 = sld [smem:[#allocation6]]
      %v362 = vstv %s361
      %363 = vst [vmem:[#allocation7] sm:$0xff] %v362
      %s364 = sld [smem:[#allocation6 + $0x1]]
      %v365 = vstv %s364
      %366 = vst [vmem:[#allocation9] sm:$0xff] %v365
      %s367 = sld [smem:[#allocation6 + $0x2]]
      %v368 = vstv %s367
      %369 = vst [vmem:[#allocation11] sm:$0xff] %v368
    $region29: #{tpu_custom_call.1} parent=1 // pred_fallthru
      _
    // Predicated region
    $region30: #{tpu_custom_call.1} parent=1 // pred_check
      _
    $region31: #{tpu_custom_call.1} parent=1 // pred_check_branch
      %371 = sbr.rel (0) target = $region33
    $region32: #{tpu_custom_call.1} parent=1 // pred_region
      %s373 = ssub.s32 128, 128
      %374 = vsyncadd [#allocation8], %s373
      %s376 = sshll.u32 [#allocation7], 4
      %s377 = int_to_ptr.vmem [resolvable:$true] %s376
      %379 = dma.vmem_to_hbm [thread:$0]  %s377, 128, %s3, [#allocation8]
    $region33: #{tpu_custom_call.1} parent=1 // pred_fallthru
      _
    // Predicated region
    $region34: #{tpu_custom_call.1} parent=1 // pred_check
      _
    $region35: #{tpu_custom_call.1} parent=1 // pred_check_branch
      %381 = sbr.rel (0) target = $region37
    $region36: #{tpu_custom_call.1} parent=1 // pred_region
      %s383 = ssub.s32 128, 128
      %384 = vsyncadd [#allocation10], %s383
      %s386 = sshll.u32 [#allocation9], 4
      %s387 = int_to_ptr.vmem [resolvable:$true] %s386
      %389 = dma.vmem_to_hbm [thread:$0]  %s387, 128, %s4, [#allocation10]
    $region37: #{tpu_custom_call.1} parent=1 // pred_fallthru
      _
    // Predicated region
    $region38: #{tpu_custom_call.1} parent=1 // pred_check
      _
    $region39: #{tpu_custom_call.1} parent=1 // pred_check_branch
      %391 = sbr.rel (0) target = $region41
    $region40: #{tpu_custom_call.1} parent=1 // pred_region
      %s393 = ssub.s32 128, 128
      %394 = vsyncadd [#allocation10], %s393
      %s396 = sshll.u32 [#allocation11], 4
      %s397 = int_to_ptr.vmem [resolvable:$true] %s396
      %399 = dma.vmem_to_hbm [thread:$0]  %s397, 128, %s5, [#allocation10]
    $region41: #{tpu_custom_call.1} parent=1 // pred_fallthru
      _
    // Predicated region
    $region42: #{tpu_custom_call.1} parent=1 // pred_check
      _
    $region43: #{tpu_custom_call.1} parent=1 // pred_check_branch
      %401 = sbr.rel (0) target = $region45
    $region44: #{tpu_custom_call.1} parent=1 // pred_region
      %402 = dma.done [#allocation8], 128
    $region45: #{tpu_custom_call.1} parent=1 // pred_fallthru
      _
    // Predicated region
    $region46: #{tpu_custom_call.1} parent=1 // pred_check
      _
    $region47: #{tpu_custom_call.1} parent=1 // pred_check_branch
      %404 = sbr.rel (0) target = $region49
    $region48: #{tpu_custom_call.1} parent=1 // pred_region
      %405 = dma.done [#allocation10], 128
    $region49: #{tpu_custom_call.1} parent=1 // pred_fallthru
      _
    // Predicated region
    $region50: #{tpu_custom_call.1} parent=1 // pred_check
      _
    $region51: #{tpu_custom_call.1} parent=1 // pred_check_branch
      %407 = sbr.rel (0) target = $region53
    $region52: #{tpu_custom_call.1} parent=1 // pred_region
      %408 = dma.done [#allocation10], 128
    $region53: #{tpu_custom_call.1} parent=1 // pred_fallthru
      _
    %409 = vsyncpa [#allocation8], 1
    %410 = vsyncpa [#allocation10], 1

</llo_original>
